<compile_context>
chip_gen: v7x
topology: tpu7x:2x2x1
jax: 0.10.0
libtpu: 0.0.40
codegen_flags: <defaults>
</compile_context>

<pallas_src>
import functools
import math

import jax
import jax.numpy as jnp
from jax.experimental import pallas as pl
from jax.experimental.pallas import tpu as pltpu


def _attn_kernel(*refs, scale, has_mask, write_attn):
    """One grid step: a (head-tile, query-tile) block against all keys.

    Block shapes (leading batch dim squeezed by the BlockSpec):
      q_ref:    (TH, TQ, D)
      k_ref:    (TH, Sk, D)
      v_ref:    (TH, Sk, D)
      mask_ref: (TH, TQ, Sk) int32, nonzero == masked   [only if has_mask]
      ctx_ref:  (TH, TQ, D)
      attn_ref: (TH, TQ, Sk)                            [only if write_attn]
    """
    it = iter(refs)
    q_ref, k_ref, v_ref = next(it), next(it), next(it)
    mask_ref = next(it) if has_mask else None
    ctx_ref = next(it)
    attn_ref = next(it) if write_attn else None

    q = q_ref[...]
    k = k_ref[...]
    v = v_ref[...]

    # Fold the scale into q (a TQ*D multiply) instead of the TQ*Sk score tile:
    # (q*s) @ k^T == s * (q @ k^T).  `if scale:` matches PyTorch truthiness
    # (scale=None or 0.0 -> no scaling).
    qs = q * scale if scale else q

    # scores = q @ k^T, batched over the head tile.  Contraction is on the
    # LAST dim of both operands (no XLU transpose of k); inputs stay in their
    # native dtype, accumulation is f32 on the MXU.
    scores = jnp.einsum("hqd,hkd->hqk", qs, k, preferred_element_type=jnp.float32)

    if has_mask:
        # masked_fill_(attn_mask, -inf): nonzero mask entries are masked out.
        scores = jnp.where(mask_ref[...] != 0, -jnp.inf, scores)

    # softmax over the key axis (dim=3 of the original 4-D tensor), in f32.
    m = jnp.max(scores, axis=-1, keepdims=True)
    e = jnp.exp(scores - m)
    denom = jnp.sum(e, axis=-1, keepdims=True)
    attn = e / denom  # exact divide: denom is only (TH,TQ,1), approx buys nothing

    # dropout(p=0.0) is the identity -> skipped.

    # context = attn @ v + q (residual).  MXU fed in v's dtype, f32 accumulate.
    ctx = jnp.einsum(
        "hqk,hkd->hqd", attn.astype(v.dtype), v, preferred_element_type=jnp.float32
    )
    ctx = ctx + q.astype(jnp.float32)

    ctx_ref[...] = ctx.astype(ctx_ref.dtype)
    if write_attn:
        attn_ref[...] = attn.astype(attn_ref.dtype)


def _vmem_limits():
    """Return (vmem_limit_bytes, per-step working-set budget).

    Sized for the tightest chip (v7x: 64 MiB physical VMEM) unless the runtime
    reports more (v5e/v6e: 128 MiB -> 96 MiB scoped limit)."""
    phys = 64 * 1024 * 1024
    try:
        phys = int(pltpu.get_tpu_info().vmem_capacity_bytes)
    except Exception:
        pass
    limit = min(phys * 3 // 4, 96 * 1024 * 1024)
    return limit, int(limit * 0.85)


def _choose_tiles(B, H, Sq, Sk, D, itemsize, write_attn, has_mask, budget):
    """Pick (head_tile, q_tile) so the double-buffered per-step set fits VMEM."""
    # Sub-32-bit dtypes pack along sublanes: q-tile granularity is dtype-aware.
    gran = {1: 32, 2: 16}.get(itemsize, 8)

    # q-tile candidates: divisors of Sq that are multiples of gran, capped at
    # 512 (HBM-roofline sweet spot); fall back to the full extent.
    tq_cands = [t for t in range(gran, min(Sq, 512) + 1, gran) if Sq % t == 0]
    if Sq <= 512 or not tq_cands:
        tq_cands.append(Sq)
    tq_cands = sorted(set(tq_cands), reverse=True)

    th_cands = sorted([d for d in range(1, H + 1) if H % d == 0], reverse=True)

    def step_bytes(th, tq):
        blocks = 2 * th * tq * D * itemsize          # q + ctx tiles
        blocks += 2 * th * Sk * D * itemsize         # k + v (resident across qi)
        if write_attn:
            blocks += th * tq * Sk * itemsize        # attn output tile
        if has_mask:
            blocks += th * tq * Sk * 4               # int32 mask tile
        blocks *= 2                                  # BlockSpec double-buffering
        temps = 4 * th * tq * Sk * 4                 # f32 scores/e/attn (+ cast)
        return blocks + temps

    best, best_area = None, -1
    for th in th_cands:
        # Keep >=2 independent (batch, head-tile) blocks so both v7x
        # TensorCores get work without sharding the (arbitrary) query axis.
        if B * H >= 2 and B * (H // th) < 2:
            continue
        for tq in tq_cands:
            if step_bytes(th, tq) <= budget and th * tq > best_area:
                best, best_area = (th, tq), th * tq
    if best is None:
        # Nothing fits (very long Sk): smallest tiles as a fallback.
        # TODO(synk): Sk tiling with online softmax for long-context safety.
        best = (1, min(tq_cands))
    return best


def scaled_dot_product_attention_dim4(q, k, v, scale=None, attn_mask=None,
                                      return_attn=True):
    """q: [B,H,Sq,D]; k,v: [B,H,Sk,D]; attn_mask broadcastable to [B,H,Sq,Sk]
    (nonzero/True == masked, matching masked_fill_ with -inf).

    Returns (context, attention) like the PyTorch module; with
    return_attn=False returns only context and skips the B*H*Sq*Sk attention
    writeback (the dominant HBM cost for realistic shapes)."""
    B, H, Sq, D = q.shape
    Sk = k.shape[2]
    assert k.shape == (B, H, Sk, D) and v.shape == (B, H, Sk, D)

    has_mask = attn_mask is not None
    vmem_limit, budget = _vmem_limits()
    th, tq = _choose_tiles(B, H, Sq, Sk, D, q.dtype.itemsize,
                           return_attn, has_mask, budget)
    grid = (B, H // th, Sq // tq)

    in_specs = [
        pl.BlockSpec((None, th, tq, D), lambda b, h, qi: (b, h, qi, 0)),
        # k / v: block index independent of qi -> stay VMEM-resident while the
        # ("arbitrary") query axis is swept consecutively on one core.
        pl.BlockSpec((None, th, Sk, D), lambda b, h, qi: (b, h, 0, 0)),
        pl.BlockSpec((None, th, Sk, D), lambda b, h, qi: (b, h, 0, 0)),
    ]
    args = [q, k, v]
    if has_mask:
        mask = jnp.broadcast_to(attn_mask, (B, H, Sq, Sk)).astype(jnp.int32)
        in_specs.append(
            pl.BlockSpec((None, th, tq, Sk), lambda b, h, qi: (b, h, qi, 0)))
        args.append(mask)

    out_specs = [pl.BlockSpec((None, th, tq, D), lambda b, h, qi: (b, h, qi, 0))]
    out_shape = [jax.ShapeDtypeStruct((B, H, Sq, D), q.dtype)]
    if return_attn:
        out_specs.append(
            pl.BlockSpec((None, th, tq, Sk), lambda b, h, qi: (b, h, qi, 0)))
        out_shape.append(jax.ShapeDtypeStruct((B, H, Sq, Sk), q.dtype))

    itemsize = q.dtype.itemsize
    bytes_accessed = (2 * B * H * Sk * D + 2 * B * H * Sq * D) * itemsize
    if return_attn:
        bytes_accessed += B * H * Sq * Sk * itemsize
    if has_mask:
        bytes_accessed += B * H * Sq * Sk * 4
    cost = pl.CostEstimate(
        flops=4 * B * H * Sq * Sk * D,        # two matmuls
        transcendentals=B * H * Sq * Sk,      # exp in softmax
        bytes_accessed=bytes_accessed,
    )

    outs = pl.pallas_call(
        functools.partial(_attn_kernel, scale=scale, has_mask=has_mask,
                          write_attn=return_attn),
        grid=grid,
        in_specs=in_specs,
        out_specs=out_specs,
        out_shape=out_shape,
        compiler_params=pltpu.CompilerParams(
            # B / head-tile axes shard across TensorCores (v7x megacore); the
            # query axis is "arbitrary" so k/v residency is preserved.
            dimension_semantics=("parallel", "parallel", "arbitrary"),
            vmem_limit_bytes=vmem_limit,
        ),
        cost_estimate=cost,
    )(*args)

    if return_attn:
        return outs[0], outs[1]
    return outs[0]


def _reference(q, k, v, scale=None, attn_mask=None):
    scores = jnp.einsum("bhqd,bhkd->bhqk", q, k)
    if scale:
        scores = scores * scale
    if attn_mask is not None:
        scores = jnp.where(jnp.asarray(attn_mask) != 0, -jnp.inf, scores)
    attn = jax.nn.softmax(scores, axis=3)
    ctx = jnp.einsum("bhqk,bhkd->bhqd", attn, v) + q
    return ctx, attn


if __name__ == "__main__":
    # Small shapes consistent with a 4-D attention call: [B, H, S, D]
    B, H, S, D = 2, 4, 8, 32
    key = jax.random.PRNGKey(0)
    kq, kk, kv = jax.random.split(key, 3)
    q = jax.random.normal(kq, (B, H, S, D), dtype=jnp.float32)
    k = jax.random.normal(kk, (B, H, S, D), dtype=jnp.float32)
    v = jax.random.normal(kv, (B, H, S, D), dtype=jnp.float32)
    scale = 1.0 / math.sqrt(D)

    # 1) full forward: (context, attention), matching the PyTorch module
    ctx, attn = scaled_dot_product_attention_dim4(q, k, v, scale=scale)
    jax.block_until_ready(ctx)
    jax.block_until_ready(attn)
    ctx_ref, attn_ref = _reference(q, k, v, scale=scale)
    assert jnp.allclose(ctx, ctx_ref, atol=1e-4, rtol=1e-4)
    assert jnp.allclose(attn, attn_ref, atol=1e-4, rtol=1e-4)

    # 2) masked path (causal mask, nonzero == masked out)
    causal = jnp.triu(jnp.ones((S, S), dtype=jnp.int32), k=1)[None, None]
    ctx_m, attn_m = scaled_dot_product_attention_dim4(
        q, k, v, scale=scale, attn_mask=causal)
    jax.block_until_ready(ctx_m)
    ctx_mr, attn_mr = _reference(
        q, k, v, scale=scale, attn_mask=jnp.broadcast_to(causal, (B, H, S, S)))
    assert jnp.allclose(ctx_m, ctx_mr, atol=1e-4, rtol=1e-4)
    assert jnp.allclose(attn_m, attn_mr, atol=1e-4, rtol=1e-4)

    # 3) context-only path (skips the B*H*Sq*Sk attention writeback)
    ctx_only = scaled_dot_product_attention_dim4(
        q, k, v, scale=scale, return_attn=False)
    jax.block_until_ready(ctx_only)
    assert jnp.allclose(ctx_only, ctx_ref, atol=1e-4, rtol=1e-4)

    print("KERNEL_OK")
</pallas_src>

<mosaic_0001>
module attributes {stable_mosaic.version = 11 : i64} {
  func.func @_attn_kernel(%arg0: i32, %arg1: i32, %arg2: i32, %arg3: memref<1x4x8x32xf32, #tpu.memory_space<vmem>>, %arg4: memref<1x4x8x32xf32, #tpu.memory_space<vmem>>, %arg5: memref<1x4x8x32xf32, #tpu.memory_space<vmem>>, %arg6: memref<1x4x8x32xf32, #tpu.memory_space<vmem>>, %arg7: memref<1x4x8x8xf32, #tpu.memory_space<vmem>>) attributes {dimension_semantics = [#tpu.dimension_semantics<parallel>, #tpu.dimension_semantics<parallel>, #tpu.dimension_semantics<arbitrary>], iteration_bounds = array<i64: 2, 1, 1>, scalar_prefetch = 0 : i64, scratch_operands = 0 : i64, tpu.core_type = #tpu.core_type<tc>, window_params = [{transform_indices = @transform_0, window_bounds = array<i64: 1, 4, 8, 32>}, {transform_indices = @transform_1, window_bounds = array<i64: 1, 4, 8, 32>}, {transform_indices = @transform_2, window_bounds = array<i64: 1, 4, 8, 32>}, {transform_indices = @transform_3, window_bounds = array<i64: 1, 4, 8, 32>}, {transform_indices = @transform_4, window_bounds = array<i64: 1, 4, 8, 8>}]} {
    %c0 = arith.constant 0 : index
    %c0_0 = arith.constant 0 : index
    %c0_1 = arith.constant 0 : index
    %c0_2 = arith.constant 0 : index
    %0 = vector.load %arg3[%c0, %c0_0, %c0_1, %c0_2] : memref<1x4x8x32xf32, #tpu.memory_space<vmem>>, vector<1x4x8x32xf32>
    %1 = vector.shape_cast %0 : vector<1x4x8x32xf32> to vector<4x8x32xf32>
    %c0_3 = arith.constant 0 : index
    %c0_4 = arith.constant 0 : index
    %c0_5 = arith.constant 0 : index
    %c0_6 = arith.constant 0 : index
    %2 = vector.load %arg4[%c0_3, %c0_4, %c0_5, %c0_6] : memref<1x4x8x32xf32, #tpu.memory_space<vmem>>, vector<1x4x8x32xf32>
    %3 = vector.shape_cast %2 : vector<1x4x8x32xf32> to vector<4x8x32xf32>
    %c0_7 = arith.constant 0 : index
    %c0_8 = arith.constant 0 : index
    %c0_9 = arith.constant 0 : index
    %c0_10 = arith.constant 0 : index
    %4 = vector.load %arg5[%c0_7, %c0_8, %c0_9, %c0_10] : memref<1x4x8x32xf32, #tpu.memory_space<vmem>>, vector<1x4x8x32xf32>
    %5 = vector.shape_cast %4 : vector<1x4x8x32xf32> to vector<4x8x32xf32>
    %cst = arith.constant 0.176776692 : f32
    %6 = vector.broadcast %cst : f32 to vector<4x8x32xf32>
    %7 = arith.mulf %1, %6 : vector<4x8x32xf32>
    "tpu.trace_start"() <{level = 10 : i32, message = "hqd,hkd->hqk"}> : () -> ()
    %cst_11 = arith.constant dense<0.000000e+00> : vector<4x8x8xf32>
    %8 = tpu.matmul %7, %3, %cst_11 {dimension_numbers = #tpu.dot_dimension_numbers<[2], [2], [1], [1], [0, 0, 0, 1, 1, 1], [0], [0]>} : vector<4x8x32xf32>, vector<4x8x32xf32>, vector<4x8x8xf32> -> vector<4x8x8xf32>
    "tpu.trace_stop"() : () -> ()
    %cst_12 = arith.constant dense<0xFF800000> : vector<4x8xf32>
    %9 = vector.multi_reduction <maximumf>, %8, %cst_12 [2] : vector<4x8x8xf32> to vector<4x8xf32>
    %10 = vector.shape_cast %9 : vector<4x8xf32> to vector<4x8x1xf32>
    %11 = vector.broadcast %10 : vector<4x8x1xf32> to vector<4x8x8xf32>
    %12 = arith.subf %8, %11 : vector<4x8x8xf32>
    %13 = math.exp %12 : vector<4x8x8xf32>
    %cst_13 = arith.constant dense<0.000000e+00> : vector<4x8xf32>
    %14 = vector.multi_reduction <add>, %13, %cst_13 [2] : vector<4x8x8xf32> to vector<4x8xf32>
    %15 = vector.shape_cast %14 : vector<4x8xf32> to vector<4x8x1xf32>
    %16 = vector.broadcast %15 : vector<4x8x1xf32> to vector<4x8x8xf32>
    %17 = arith.divf %13, %16 : vector<4x8x8xf32>
    "tpu.trace_start"() <{level = 10 : i32, message = "hqk,hkd->hqd"}> : () -> ()
    %cst_14 = arith.constant dense<0.000000e+00> : vector<4x8x32xf32>
    %18 = tpu.matmul %17, %5, %cst_14 {dimension_numbers = #tpu.dot_dimension_numbers<[2], [1], [1], [2], [0, 0, 0, 1, 1, 2], [0], [0]>} : vector<4x8x8xf32>, vector<4x8x32xf32>, vector<4x8x32xf32> -> vector<4x8x32xf32>
    "tpu.trace_stop"() : () -> ()
    %19 = arith.addf %18, %1 : vector<4x8x32xf32>
    %c0_15 = arith.constant 0 : index
    %c0_16 = arith.constant 0 : index
    %c0_17 = arith.constant 0 : index
    %c0_18 = arith.constant 0 : index
    %20 = vector.load %arg6[%c0_15, %c0_16, %c0_17, %c0_18] : memref<1x4x8x32xf32, #tpu.memory_space<vmem>>, vector<1x4x8x32xf32>
    %21 = vector.shape_cast %20 : vector<1x4x8x32xf32> to vector<4x8x32xf32>
    %22 = vector.shape_cast %19 : vector<4x8x32xf32> to vector<1x4x8x32xf32>
    tpu.vector_store %arg6[%c0_15, %c0_16, %c0_17, %c0_18], %22 {strides = array<i32>} : memref<1x4x8x32xf32, #tpu.memory_space<vmem>>, vector<1x4x8x32xf32>,
    %c0_19 = arith.constant 0 : index
    %c0_20 = arith.constant 0 : index
    %c0_21 = arith.constant 0 : index
    %c0_22 = arith.constant 0 : index
    %23 = vector.load %arg7[%c0_19, %c0_20, %c0_21, %c0_22] : memref<1x4x8x8xf32, #tpu.memory_space<vmem>>, vector<1x4x8x8xf32>
    %24 = vector.shape_cast %23 : vector<1x4x8x8xf32> to vector<4x8x8xf32>
    %25 = vector.shape_cast %17 : vector<4x8x8xf32> to vector<1x4x8x8xf32>
    tpu.vector_store %arg7[%c0_19, %c0_20, %c0_21, %c0_22], %25 {strides = array<i32>} : memref<1x4x8x8xf32, #tpu.memory_space<vmem>>, vector<1x4x8x8xf32>,
    return
  }
  func.func @transform_0(%arg0: i32, %arg1: i32, %arg2: i32) -> (i32, i32, i32, i32) {
    %c0_i32 = arith.constant 0 : i32
    %c0_i32_0 = arith.constant 0 : i32
    return %arg0, %arg1, %arg2, %c0_i32 : i32, i32, i32, i32
  }
  func.func @transform_1(%arg0: i32, %arg1: i32, %arg2: i32) -> (i32, i32, i32, i32) {
    %c0_i32 = arith.constant 0 : i32
    %c0_i32_0 = arith.constant 0 : i32
    %c0_i32_1 = arith.constant 0 : i32
    return %arg0, %arg1, %c0_i32, %c0_i32_0 : i32, i32, i32, i32
  }
  func.func @transform_2(%arg0: i32, %arg1: i32, %arg2: i32) -> (i32, i32, i32, i32) {
    %c0_i32 = arith.constant 0 : i32
    %c0_i32_0 = arith.constant 0 : i32
    %c0_i32_1 = arith.constant 0 : i32
    return %arg0, %arg1, %c0_i32, %c0_i32_0 : i32, i32, i32, i32
  }
  func.func @transform_3(%arg0: i32, %arg1: i32, %arg2: i32) -> (i32, i32, i32, i32) {
    %c0_i32 = arith.constant 0 : i32
    %c0_i32_0 = arith.constant 0 : i32
    return %arg0, %arg1, %arg2, %c0_i32 : i32, i32, i32, i32
  }
  func.func @transform_4(%arg0: i32, %arg1: i32, %arg2: i32) -> (i32, i32, i32, i32) {
    %c0_i32 = arith.constant 0 : i32
    %c0_i32_0 = arith.constant 0 : i32
    return %arg0, %arg1, %arg2, %c0_i32 : i32, i32, i32, i32
  }
}

</mosaic_0001>

<llo_original>
// kernel: tpu_custom_call.1
$region0: #{tpu_custom_call.1}
  #allocation0 [shape = 'u32[]', space=smem, size = 0x4, offset = 0x4, fixed_abs, tag = 'smem constant byte address 0x4 - core index']
  #allocation1 [shape = 'u32[144,128]{1,0:T(1,128)}', space=vmem, size = 0x12000, scoped, tag = 'internal scratch']
  %s0 = inlined_call_operand.hbm [shape: f32[2,4,8,32], index: 0, kind: input, shape index: {}]
  %s1 = inlined_call_operand.hbm [shape: f32[2,4,8,32], index: 1, kind: input, shape index: {}]
  %s2 = inlined_call_operand.hbm [shape: f32[2,4,8,32], index: 2, kind: input, shape index: {}]
  %s3 = inlined_call_operand.hbm [shape: f32[2,4,8,32], index: 3, kind: output, shape index: {0}]
  %s4 = inlined_call_operand.hbm [shape: f32[2,4,8,8], index: 4, kind: output, shape index: {1}]
  %5 = xla_tuple %s3, %s4
  %s6 = sld [smem:[#allocation0]]
  $region65: #{tpu_custom_call.1} parent=0
    _
  %s8 = ssub.s32 1, %s6
  %s9 = scalar_select 0, %s8, %s6
  $region1: #{tpu_custom_call.1} parent=0
    #allocation2 [shape = 'u8[32768]{0}', space=vmem, size = 0x8000, scoped, tag = 'input window, operand 0']
    #allocation3 [shape = 's32[2]{0}', space=sflag, size = 0x8, scoped, tag = 'scoped memory for tpu_custom_call.1']
    #allocation4 [shape = 's32[2]{0}', space=sflag, size = 0x8, scoped, tag = 'scoped memory for tpu_custom_call.1']
    #allocation5 [shape = 'u8[32768]{0}', space=vmem, size = 0x8000, scoped, tag = 'input window, operand 1']
    #allocation6 [shape = 's32[2]{0}', space=sflag, size = 0x8, scoped, tag = 'scoped memory for tpu_custom_call.1']
    #allocation7 [shape = 'u8[32768]{0}', space=vmem, size = 0x8000, scoped, tag = 'input window, operand 2']
    #allocation8 [shape = 'u8[32768]{0}', space=vmem, size = 0x8000, scoped, tag = 'output window, operand 0']
    #allocation9 [shape = 'u8[32768]{0}', space=vmem, size = 0x8000, scoped, tag = 'output window, operand 1']
    #allocation10 [shape = 's32[2]{0}', space=sflag, size = 0x8, scoped, tag = 'scoped memory for tpu_custom_call.1']
    %10 = vsyncpa [#allocation3], 0
    %s11 = scalar_lea.sflag [#allocation3], 1
    %12 = vsyncpa %s11, 0
    %13 = vsyncpa [#allocation6], 0
    %s14 = scalar_lea.sflag [#allocation6], 1
    %15 = vsyncpa %s14, 0
    %16 = vsyncpa [#allocation4], 0
    %s17 = scalar_lea.sflag [#allocation4], 1
    %18 = vsyncpa %s17, 0
    %19 = vsyncpa [#allocation10], 0
    %s20 = scalar_lea.sflag [#allocation10], 1
    %21 = vsyncpa %s20, 0
    loop: start=0, step=1, limit=4
    $region2: #{tpu_custom_call.1} parent=1 // loop_pre_header
      _
    $region3: #{tpu_custom_call.1} parent=1 // loop_header
      %s23 = sphi 0, %s27
      %p24 = scmp.ge.s32.totalorder %s23, 4
      %s30 = sphi 0, %s49
      %s31 = sphi 0, %s45
      %s32 = sphi 0, %s41
      %s33 = sphi 0, %s30
      %s34 = sphi 0, %s31
      %s35 = sphi 0, %s32
      %s36 = sphi 0, %s33
      %s37 = sphi 0, %s34
      %s38 = sphi 0, %s35
      %s56 = sphi 0, %s58
      %s59 = sphi 0, %s56
      %s60 = sphi 0, %s59
      %s76 = sphi 0, %s60
      %s84 = sphi 0, %s86
      %s87 = sphi 0, %s84
      %s88 = sphi 0, %s87
      %s104 = sphi 0, %s88
      %s112 = sphi 0, %s114
      %s115 = sphi 0, %s112
      %s116 = sphi 0, %s115
      %s132 = sphi 0, %s116
      %s142 = sphi 0, %s144
      %s145 = sphi 0, %s142
      %s146 = sphi 0, %s145
      %s162 = sphi 0, %s146
      %s172 = sphi 0, %s174
      %s175 = sphi 0, %s172
      %s176 = sphi 0, %s175
      %s192 = sphi 0, %s176
    $region4: #{tpu_custom_call.1} parent=1 // loop_header_branch
      %26 = sbr.rel (%p24) target = $region8
    $region5: #{tpu_custom_call.1} parent=1 // loop_body
      %s28 = ssub.s32 %s23, 1
      %s29 = ssub.s32 %s23, 2
      %s39 = sadd.s32 1, %s32
      %p40 = scmp.ge.s32.totalorder %s39, 1
      %s41 = scalar_select %p40, 0, %s39
      %s42 = sadd.s32 1, %s31
      %s43 = scalar_select %p40, %s42, %s31
      %p44 = scmp.ge.s32.totalorder %s43, 1
      %s45 = scalar_select %p44, 0, %s43
      %s46 = sadd.s32 1, %s30
      %s47 = scalar_select %p44, %s46, %s30
      %p48 = scmp.ge.s32.totalorder %s47, 2
      %s49 = scalar_select %p48, 0, %s47
      %s50 = ssub.s32 %s30, %s49
      %s51 = ssub.s32 %s31, %s45
      %s52 = sor.u32 %s50, %s51
      %s53 = ssub.s32 %s32, %s41
      %s54 = sor.u32 %s52, %s53
      %p55 = scmp.eq.s32.totalorder %s54, 0
      %s57 = sadd.s32 %s56, 1
      %s58 = scalar_select %p55, %s56, %s57
      %p61 = pneg %p55
      %p62 = scmp.eq.s32.totalorder %s23, 1
      %p63 = por %p61, %p62
      %p64 = scmp.ne.s32.totalorder %s56, %s59
      %p65 = scmp.eq.s32.totalorder %s23, 0
      %p66 = por %p64, %p65
      %p67 = scmp.ne.s32.totalorder %s56, %s59
      %p68 = scmp.eq.s32.totalorder %s28, 1
      %p69 = por %p67, %p68
      %p70 = scmp.ne.s32.totalorder %s59, %s60
      %p71 = scmp.eq.s32.totalorder %s28, 0
      %p72 = por %p70, %p71
      %p73 = scmp.ne.s32.totalorder %s59, %s60
      %p74 = scmp.eq.s32.totalorder %s29, 1
      %p75 = por %p73, %p74
      %p77 = scmp.ne.s32.totalorder %s60, %s76
      %p78 = scmp.eq.s32.totalorder %s29, 0
      %p79 = por %p77, %p78
      %s80 = ssub.s32 %s30, %s49
      %s81 = ssub.s32 %s31, %s45
      %s82 = sor.u32 %s80, %s81
      %p83 = scmp.eq.s32.totalorder %s82, 0
      %s85 = sadd.s32 %s84, 1
      %s86 = scalar_select %p83, %s84, %s85
      %p89 = pneg %p83
      %p90 = scmp.eq.s32.totalorder %s23, 1
      %p91 = por %p89, %p90
      %p92 = scmp.ne.s32.totalorder %s84, %s87
      %p93 = scmp.eq.s32.totalorder %s23, 0
      %p94 = por %p92, %p93
      %p95 = scmp.ne.s32.totalorder %s84, %s87
      %p96 = scmp.eq.s32.totalorder %s28, 1
      %p97 = por %p95, %p96
      %p98 = scmp.ne.s32.totalorder %s87, %s88
      %p99 = scmp.eq.s32.totalorder %s28, 0
      %p100 = por %p98, %p99
      %p101 = scmp.ne.s32.totalorder %s87, %s88
      %p102 = scmp.eq.s32.totalorder %s29, 1
      %p103 = por %p101, %p102
      %p105 = scmp.ne.s32.totalorder %s88, %s104
      %p106 = scmp.eq.s32.totalorder %s29, 0
      %p107 = por %p105, %p106
      %s108 = ssub.s32 %s30, %s49
      %s109 = ssub.s32 %s31, %s45
      %s110 = sor.u32 %s108, %s109
      %p111 = scmp.eq.s32.totalorder %s110, 0
      %s113 = sadd.s32 %s112, 1
      %s114 = scalar_select %p111, %s112, %s113
      %p117 = pneg %p111
      %p118 = scmp.eq.s32.totalorder %s23, 1
      %p119 = por %p117, %p118
      %p120 = scmp.ne.s32.totalorder %s112, %s115
      %p121 = scmp.eq.s32.totalorder %s23, 0
      %p122 = por %p120, %p121
      %p123 = scmp.ne.s32.totalorder %s112, %s115
      %p124 = scmp.eq.s32.totalorder %s28, 1
      %p125 = por %p123, %p124
      %p126 = scmp.ne.s32.totalorder %s115, %s116
      %p127 = scmp.eq.s32.totalorder %s28, 0
      %p128 = por %p126, %p127
      %p129 = scmp.ne.s32.totalorder %s115, %s116
      %p130 = scmp.eq.s32.totalorder %s29, 1
      %p131 = por %p129, %p130
      %p133 = scmp.ne.s32.totalorder %s116, %s132
      %p134 = scmp.eq.s32.totalorder %s29, 0
      %p135 = por %p133, %p134
      %s136 = ssub.s32 %s30, %s49
      %s137 = ssub.s32 %s31, %s45
      %s138 = sor.u32 %s136, %s137
      %s139 = ssub.s32 %s32, %s41
      %s140 = sor.u32 %s138, %s139
      %p141 = scmp.eq.s32.totalorder %s140, 0
      %s143 = sadd.s32 %s142, 1
      %s144 = scalar_select %p141, %s142, %s143
      %p147 = pneg %p141
      %p148 = scmp.eq.s32.totalorder %s23, 1
      %p149 = por %p147, %p148
      %p150 = scmp.ne.s32.totalorder %s142, %s145
      %p151 = scmp.eq.s32.totalorder %s23, 0
      %p152 = por %p150, %p151
      %p153 = scmp.ne.s32.totalorder %s142, %s145
      %p154 = scmp.eq.s32.totalorder %s28, 1
      %p155 = por %p153, %p154
      %p156 = scmp.ne.s32.totalorder %s145, %s146
      %p157 = scmp.eq.s32.totalorder %s28, 0
      %p158 = por %p156, %p157
      %p159 = scmp.ne.s32.totalorder %s145, %s146
      %p160 = scmp.eq.s32.totalorder %s29, 1
      %p161 = por %p159, %p160
      %p163 = scmp.ne.s32.totalorder %s146, %s162
      %p164 = scmp.eq.s32.totalorder %s29, 0
      %p165 = por %p163, %p164
      %s166 = ssub.s32 %s30, %s49
      %s167 = ssub.s32 %s31, %s45
      %s168 = sor.u32 %s166, %s167
      %s169 = ssub.s32 %s32, %s41
      %s170 = sor.u32 %s168, %s169
      %p171 = scmp.eq.s32.totalorder %s170, 0
      %s173 = sadd.s32 %s172, 1
      %s174 = scalar_select %p171, %s172, %s173
      %p177 = pneg %p171
      %p178 = scmp.eq.s32.totalorder %s23, 1
      %p179 = por %p177, %p178
      %p180 = scmp.ne.s32.totalorder %s172, %s175
      %p181 = scmp.eq.s32.totalorder %s23, 0
      %p182 = por %p180, %p181
      %p183 = scmp.ne.s32.totalorder %s172, %s175
      %p184 = scmp.eq.s32.totalorder %s28, 1
      %p185 = por %p183, %p184
      %p186 = scmp.ne.s32.totalorder %s175, %s176
      %p187 = scmp.eq.s32.totalorder %s28, 0
      %p188 = por %p186, %p187
      %p189 = scmp.ne.s32.totalorder %s175, %s176
      %p190 = scmp.eq.s32.totalorder %s29, 1
      %p191 = por %p189, %p190
      %p193 = scmp.ne.s32.totalorder %s176, %s192
      %p194 = scmp.eq.s32.totalorder %s29, 0
      %p195 = por %p193, %p194
      %p196 = scmp.le.s32.totalorder 1, %s23
      %p197 = scmp.lt.s32.totalorder %s23, 3
      %p198 = pnand %p196, %p197
      %p199 = pneg %p198
      // Predicated region
      $region9: #{tpu_custom_call.1} parent=5 // pred_check
        _
      $region10: #{tpu_custom_call.1} parent=5 // pred_check_branch
        %201 = sbr.rel (%p198) target = $region12
      $region11: #{tpu_custom_call.1} parent=5 // pred_region
        %s202 = ssub.s32 %s23, 1
      $region12: #{tpu_custom_call.1} parent=5 // pred_fallthru
        _
      %p203 = scmp.lt.s32.totalorder %s23, 2
      // Predicated region
      $region13: #{tpu_custom_call.1} parent=5 // pred_check
        %p204 = pneg %p203
      $region14: #{tpu_custom_call.1} parent=5 // pred_check_branch
        %206 = sbr.rel (%p204) target = $region16
      $region15: #{tpu_custom_call.1} parent=5 // pred_region
        // Predicated region
        $region17: #{tpu_custom_call.1} parent=15 // pred_check
          %p207 = pneg %p66
        $region18: #{tpu_custom_call.1} parent=15 // pred_check_branch
          %209 = sbr.rel (%p207) target = $region20
        $region19: #{tpu_custom_call.1} parent=15 // pred_region
          %s210 = sand.u32 %s56, 1
          %s211 = scalar_lea.sflag [#allocation3], %s210
          %s212 = sand.u32 %s56, 1
          %s213 = smul.addr %s212, 32
          %s214 = scalar_lea.vmem [#allocation2], %s213
          %s215 = smul.u32 4, %s31
          %s217 = ssub.s32 512, 512
          %218 = vsyncadd %s211, %s217
          %s219 = sadd.s32 %s32, %s215
          %s220 = smul.addr %s30, 4
          %s221 = sadd.s32 %s219, %s220
          %s222 = smul.addr %s221, 128
          %s223 = scalar_lea.hbm %s0, %s222
          %s224 = sshll.u32 %s214, 4
          %s225 = int_to_ptr.vmem [resolvable:$true] %s224
          %230 = dma.hbm_to_vmem [thread:$0]  %s223, 512, %s225, %s211, 128, 128, 8
        $region20: #{tpu_custom_call.1} parent=15 // pred_fallthru
          _
        // Predicated region
        $region21: #{tpu_custom_call.1} parent=15 // pred_check
          %p231 = pneg %p94
        $region22: #{tpu_custom_call.1} parent=15 // pred_check_branch
          %233 = sbr.rel (%p231) target = $region24
        $region23: #{tpu_custom_call.1} parent=15 // pred_region
          %s234 = sand.u32 %s23, 1
          %s235 = scalar_lea.sflag [#allocation6], %s234
          %s236 = sand.u32 %s84, 1
          %s237 = smul.addr %s236, 32
          %s238 = scalar_lea.vmem [#allocation5], %s237
          %s239 = smul.u32 4, %s31
          %s241 = ssub.s32 512, 512
          %242 = vsyncadd %s235, %s241
          %s243 = smul.addr %s30, 4
          %s244 = sadd.s32 %s239, %s243
          %s245 = smul.addr %s244, 128
          %s246 = scalar_lea.hbm %s1, %s245
          %s247 = sshll.u32 %s238, 4
          %s248 = int_to_ptr.vmem [resolvable:$true] %s247
          %253 = dma.hbm_to_vmem [thread:$0]  %s246, 512, %s248, %s235, 128, 128, 8
        $region24: #{tpu_custom_call.1} parent=15 // pred_fallthru
          _
        // Predicated region
        $region25: #{tpu_custom_call.1} parent=15 // pred_check
          %p254 = pneg %p122
        $region26: #{tpu_custom_call.1} parent=15 // pred_check_branch
          %256 = sbr.rel (%p254) target = $region28
        $region27: #{tpu_custom_call.1} parent=15 // pred_region
          %s257 = sand.u32 %s23, 1
          %s258 = scalar_lea.sflag [#allocation6], %s257
          %s259 = sand.u32 %s112, 1
          %s260 = smul.addr %s259, 32
          %s261 = scalar_lea.vmem [#allocation7], %s260
          %s262 = smul.u32 4, %s31
          %s264 = ssub.s32 512, 512
          %265 = vsyncadd %s258, %s264
          %s266 = smul.addr %s30, 4
          %s267 = sadd.s32 %s262, %s266
          %s268 = smul.addr %s267, 128
          %s269 = scalar_lea.hbm %s2, %s268
          %s270 = sshll.u32 %s261, 4
          %s271 = int_to_ptr.vmem [resolvable:$true] %s270
          %276 = dma.hbm_to_vmem [thread:$0]  %s269, 512, %s271, %s258, 128, 128, 8
        $region28: #{tpu_custom_call.1} parent=15 // pred_fallthru
          _
      $region16: #{tpu_custom_call.1} parent=5 // pred_fallthru
        _
      %p277 = scmp.le.s32.totalorder 1, %s23
      %p278 = scmp.lt.s32.totalorder %s23, 3
      %p279 = pnand %p277, %p278
      %p280 = pneg %p279
      // Predicated region
      $region29: #{tpu_custom_call.1} parent=5 // pred_check
        _
      $region30: #{tpu_custom_call.1} parent=5 // pred_check_branch
        %282 = sbr.rel (%p279) target = $region32
      $region31: #{tpu_custom_call.1} parent=5 // pred_region
        %s283 = ssub.s32 %s23, 1
        %s284 = sand.u32 %s59, 1
        %s285 = scalar_lea.sflag [#allocation3], %s284
        %s286 = sand.u32 %s59, 1
        %s287 = smul.addr %s286, 32
        %s288 = scalar_lea.vmem [#allocation2], %s287
        // Predicated region
        $region33: #{tpu_custom_call.1} parent=31 // pred_check
          %p289 = pneg %p72
        $region34: #{tpu_custom_call.1} parent=31 // pred_check_branch
          %291 = sbr.rel (%p289) target = $region36
        $region35: #{tpu_custom_call.1} parent=31 // pred_region
          %292 = dma.done %s285, 512
        $region36: #{tpu_custom_call.1} parent=31 // pred_fallthru
          _
        %s293 = sand.u32 %s28, 1
        %s294 = scalar_lea.sflag [#allocation6], %s293
        %s295 = sand.u32 %s87, 1
        %s296 = smul.addr %s295, 32
        %s297 = scalar_lea.vmem [#allocation5], %s296
        // Predicated region
        $region37: #{tpu_custom_call.1} parent=31 // pred_check
          %p298 = pneg %p100
        $region38: #{tpu_custom_call.1} parent=31 // pred_check_branch
          %300 = sbr.rel (%p298) target = $region40
        $region39: #{tpu_custom_call.1} parent=31 // pred_region
          %301 = dma.done %s294, 512
        $region40: #{tpu_custom_call.1} parent=31 // pred_fallthru
          _
        %s302 = sand.u32 %s28, 1
        %s303 = scalar_lea.sflag [#allocation6], %s302
        %s304 = sand.u32 %s115, 1
        %s305 = smul.addr %s304, 32
        %s306 = scalar_lea.vmem [#allocation7], %s305
        // Predicated region
        $region41: #{tpu_custom_call.1} parent=31 // pred_check
          %p307 = pneg %p128
        $region42: #{tpu_custom_call.1} parent=31 // pred_check_branch
          %309 = sbr.rel (%p307) target = $region44
        $region43: #{tpu_custom_call.1} parent=31 // pred_region
          %310 = dma.done %s303, 512
        $region44: #{tpu_custom_call.1} parent=31 // pred_fallthru
          _
        %s311 = sand.u32 %s59, 1
        %s312 = scalar_lea.sflag [#allocation3], %s311
        %s313 = sand.u32 %s59, 1
        %s314 = smul.addr %s313, 32
        %s315 = scalar_lea.vmem [#allocation2], %s314
        %p316 = pneg %p72
        %p317 = pneg %p69
        %s318 = sand.u32 %s28, 1
        %s319 = scalar_lea.sflag [#allocation6], %s318
        %s320 = sand.u32 %s87, 1
        %s321 = smul.addr %s320, 32
        %s322 = scalar_lea.vmem [#allocation5], %s321
        %p323 = pneg %p100
        %p324 = pneg %p97
        %s325 = sand.u32 %s28, 1
        %s326 = scalar_lea.sflag [#allocation6], %s325
        %s327 = sand.u32 %s115, 1
        %s328 = smul.addr %s327, 32
        %s329 = scalar_lea.vmem [#allocation7], %s328
        %p330 = pneg %p128
        %p331 = pneg %p125
        %p332 = pneg %p158
        %p333 = pneg %p155
        %s334 = sand.u32 %s145, 1
        %s335 = scalar_lea.sflag [#allocation4], %s334
        %s336 = sand.u32 %s145, 1
        %s337 = smul.addr %s336, 32
        %s338 = scalar_lea.vmem [#allocation8], %s337
        %p339 = pneg %p188
        %p340 = pneg %p185
        %s341 = sand.u32 %s175, 1
        %s342 = scalar_lea.sflag [#allocation10], %s341
        %s343 = sand.u32 %s175, 1
        %s344 = smul.addr %s343, 32
        %s345 = scalar_lea.vmem [#allocation9], %s344
        %s346 = smul.u32 4, %s34
        %s347 = smul.u32 4, %s34
        %s348 = smul.u32 4, %s34
        %s349 = smul.u32 4, %s34
        %s350 = smul.u32 4, %s34
        %v351 = vld [vmem:[%s288] sm:$0xff]
        %v352 = vld [vmem:[%s288 + $0x8] sm:$0xff]
        %v353 = vld [vmem:[%s288 + $0x10] sm:$0xff]
        %v354 = vld [vmem:[%s288 + $0x18] sm:$0xff]
        %v355 = vld [vmem:[%s297] sm:$0xff]
        %v356 = vld [vmem:[%s297 + $0x8] sm:$0xff]
        %v357 = vld [vmem:[%s297 + $0x10] sm:$0xff]
        %v358 = vld [vmem:[%s297 + $0x18] sm:$0xff]
        %v359 = vld [vmem:[%s306] sm:$0xff]
        %v360 = vld [vmem:[%s306 + $0x8] sm:$0xff]
        %v361 = vld [vmem:[%s306 + $0x10] sm:$0xff]
        %v362 = vld [vmem:[%s306 + $0x18] sm:$0xff]
        %v363 = vmul.f32 %v351, 0.17677669
        %v364 = vmul.f32 %v352, 0.17677669
        %v365 = vmul.f32 %v353, 0.17677669
        %v366 = vmul.f32 %v354, 0.17677669
        %vm367 = vcmask 261120
        %v369 = vsel %vm367, %v363, 0
        %v372 = vsel %vm367, %v355, 0
        %374 = vmatprep.subr.mxu0 0.0
        %375 = vmatpush1.xpose.msra.mxu0 %v372
        %376 = vmatprep.subr.mxu0 0.0
        %377 = vmatpush1.xpose.msra.mxu0 0.0
        %378 = vmatprep.subr.mxu0 0.0
        %379 = vmatpush1.xpose.msra.mxu0 0.0
        %380 = vmatprep.subr.mxu0 0.0
        %381 = vmatpush1.xpose.msra.mxu0 0.0
        %382 = vmatprep.subr.mxu0 0.0
        %383 = vmatpush1.xpose.msra.mxu0 0.0
        %384 = vmatprep.subr.mxu0 0.0
        %385 = vmatpush1.xpose.msra.mxu0 0.0
        %386 = vmatprep.subr.mxu0 0.0
        %387 = vmatpush1.xpose.msra.mxu0 0.0
        %388 = vmatprep.subr.mxu0 0.0
        %389 = vmatpush1.xpose.msra.mxu0 0.0
        %390 = vmatprep.subr.mxu0 0.0
        %391 = vmatpush1.xpose.msra.mxu0 0.0
        %392 = vmatprep.subr.mxu0 0.0
        %393 = vmatpush1.xpose.msra.mxu0 0.0
        %394 = vmatprep.subr.mxu0 0.0
        %395 = vmatpush1.xpose.msra.mxu0 0.0
        %396 = vmatprep.subr.mxu0 0.0
        %397 = vmatpush1.xpose.msra.mxu0 0.0
        %398 = vmatprep.subr.mxu0 0.0
        %399 = vmatpush1.xpose.msra.mxu0 0.0
        %400 = vmatprep.subr.mxu0 0.0
        %401 = vmatpush1.xpose.msra.mxu0 0.0
        %402 = vmatprep.subr.mxu0 0.0
        %403 = vmatpush1.xpose.msra.mxu0 0.0
        %404 = vmatprep.subr.mxu0 0.0
        %405 = vmatpush1.xpose.msra.mxu0 0.0
        %406 = vmatprep.subr.mxu0 0.0
        %407 = vmatpush1.xpose.msra.mxu0 0.0
        %408 = vmatprep.subr.mxu0 0.0
        %409 = vmatpush1.xpose.msra.mxu0 0.0
        %410 = vmatprep.subr.mxu0 0.0
        %411 = vmatpush1.xpose.msra.mxu0 0.0
        %412 = vmatprep.subr.mxu0 0.0
        %413 = vmatpush1.xpose.msra.mxu0 0.0
        %414 = vmatprep.subr.mxu0 0.0
        %415 = vmatpush1.xpose.msra.mxu0 0.0
        %416 = vmatprep.subr.mxu0 0.0
        %417 = vmatpush1.xpose.msra.mxu0 0.0
        %418 = vmatprep.subr.mxu0 0.0
        %419 = vmatpush1.xpose.msra.mxu0 0.0
        %420 = vmatprep.subr.mxu0 0.0
        %421 = vmatpush1.xpose.msra.mxu0 0.0
        %422 = vmatprep.subr.mxu0 0.0
        %423 = vmatpush1.xpose.msra.mxu0 0.0
        %424 = vmatprep.subr.mxu0 0.0
        %425 = vmatpush1.xpose.msra.mxu0 0.0
        %426 = vmatprep.subr.mxu0 0.0
        %427 = vmatpush1.xpose.msra.mxu0 0.0
        %428 = vmatprep.subr.mxu0 0.0
        %429 = vmatpush1.xpose.msra.mxu0 0.0
        %430 = vmatprep.subr.mxu0 0.0
        %431 = vmatpush1.xpose.msra.mxu0 0.0
        %432 = vmatprep.subr.mxu0 0.0
        %433 = vmatpush1.xpose.msra.mxu0 0.0
        %434 = vmatprep.subr.mxu0 0.0
        %435 = vmatpush1.xpose.msra.mxu0 0.0
        %436 = vmatprep.subr.mxu0 0.0
        %437 = vmatpush1.xpose.msra.mxu0 0.0
        %438 = vmatprep.mubr.f32.mxu0 0.0
        %439 = vmatmul.mubr.f32.gmra.mrb[0].mxu0 %v369
        %v440 = vpop.f32.mrb[0].mxu0
        %v441 = vadd.f32 0.0, %v440
        %v442 = vpop.f32.mrb[0].mxu0
        %443 = vdwg.mxu0
        %v445 = vsel %vm367, %v364, 0
        %v448 = vsel %vm367, %v356, 0
        %450 = vmatprep.subr.mxu0 0.0
        %451 = vmatpush1.xpose.msra.mxu0 %v448
        %452 = vmatprep.subr.mxu0 0.0
        %453 = vmatpush1.xpose.msra.mxu0 0.0
        %454 = vmatprep.subr.mxu0 0.0
        %455 = vmatpush1.xpose.msra.mxu0 0.0
        %456 = vmatprep.subr.mxu0 0.0
        %457 = vmatpush1.xpose.msra.mxu0 0.0
        %458 = vmatprep.subr.mxu0 0.0
        %459 = vmatpush1.xpose.msra.mxu0 0.0
        %460 = vmatprep.subr.mxu0 0.0
        %461 = vmatpush1.xpose.msra.mxu0 0.0
        %462 = vmatprep.subr.mxu0 0.0
        %463 = vmatpush1.xpose.msra.mxu0 0.0
        %464 = vmatprep.subr.mxu0 0.0
        %465 = vmatpush1.xpose.msra.mxu0 0.0
        %466 = vmatprep.subr.mxu0 0.0
        %467 = vmatpush1.xpose.msra.mxu0 0.0
        %468 = vmatprep.subr.mxu0 0.0
        %469 = vmatpush1.xpose.msra.mxu0 0.0
        %470 = vmatprep.subr.mxu0 0.0
        %471 = vmatpush1.xpose.msra.mxu0 0.0
        %472 = vmatprep.subr.mxu0 0.0
        %473 = vmatpush1.xpose.msra.mxu0 0.0
        %474 = vmatprep.subr.mxu0 0.0
        %475 = vmatpush1.xpose.msra.mxu0 0.0
        %476 = vmatprep.subr.mxu0 0.0
        %477 = vmatpush1.xpose.msra.mxu0 0.0
        %478 = vmatprep.subr.mxu0 0.0
        %479 = vmatpush1.xpose.msra.mxu0 0.0
        %480 = vmatprep.subr.mxu0 0.0
        %481 = vmatpush1.xpose.msra.mxu0 0.0
        %482 = vmatprep.subr.mxu0 0.0
        %483 = vmatpush1.xpose.msra.mxu0 0.0
        %484 = vmatprep.subr.mxu0 0.0
        %485 = vmatpush1.xpose.msra.mxu0 0.0
        %486 = vmatprep.subr.mxu0 0.0
        %487 = vmatpush1.xpose.msra.mxu0 0.0
        %488 = vmatprep.subr.mxu0 0.0
        %489 = vmatpush1.xpose.msra.mxu0 0.0
        %490 = vmatprep.subr.mxu0 0.0
        %491 = vmatpush1.xpose.msra.mxu0 0.0
        %492 = vmatprep.subr.mxu0 0.0
        %493 = vmatpush1.xpose.msra.mxu0 0.0
        %494 = vmatprep.subr.mxu0 0.0
        %495 = vmatpush1.xpose.msra.mxu0 0.0
        %496 = vmatprep.subr.mxu0 0.0
        %497 = vmatpush1.xpose.msra.mxu0 0.0
        %498 = vmatprep.subr.mxu0 0.0
        %499 = vmatpush1.xpose.msra.mxu0 0.0
        %500 = vmatprep.subr.mxu0 0.0
        %501 = vmatpush1.xpose.msra.mxu0 0.0
        %502 = vmatprep.subr.mxu0 0.0
        %503 = vmatpush1.xpose.msra.mxu0 0.0
        %504 = vmatprep.subr.mxu0 0.0
        %505 = vmatpush1.xpose.msra.mxu0 0.0
        %506 = vmatprep.subr.mxu0 0.0
        %507 = vmatpush1.xpose.msra.mxu0 0.0
        %508 = vmatprep.subr.mxu0 0.0
        %509 = vmatpush1.xpose.msra.mxu0 0.0
        %510 = vmatprep.subr.mxu0 0.0
        %511 = vmatpush1.xpose.msra.mxu0 0.0
        %512 = vmatprep.subr.mxu0 0.0
        %513 = vmatpush1.xpose.msra.mxu0 0.0
        %514 = vmatprep.mubr.f32.mxu0 0.0
        %515 = vmatmul.mubr.f32.gmra.mrb[0].mxu0 %v445
        %v516 = vpop.f32.mrb[0].mxu0
        %v517 = vadd.f32 0.0, %v516
        %v518 = vpop.f32.mrb[0].mxu0
        %519 = vdwg.mxu0
        %v521 = vsel %vm367, %v365, 0
        %v524 = vsel %vm367, %v357, 0
        %526 = vmatprep.subr.mxu0 0.0
        %527 = vmatpush1.xpose.msra.mxu0 %v524
        %528 = vmatprep.subr.mxu0 0.0
        %529 = vmatpush1.xpose.msra.mxu0 0.0
        %530 = vmatprep.subr.mxu0 0.0
        %531 = vmatpush1.xpose.msra.mxu0 0.0
        %532 = vmatprep.subr.mxu0 0.0
        %533 = vmatpush1.xpose.msra.mxu0 0.0
        %534 = vmatprep.subr.mxu0 0.0
        %535 = vmatpush1.xpose.msra.mxu0 0.0
        %536 = vmatprep.subr.mxu0 0.0
        %537 = vmatpush1.xpose.msra.mxu0 0.0
        %538 = vmatprep.subr.mxu0 0.0
        %539 = vmatpush1.xpose.msra.mxu0 0.0
        %540 = vmatprep.subr.mxu0 0.0
        %541 = vmatpush1.xpose.msra.mxu0 0.0
        %542 = vmatprep.subr.mxu0 0.0
        %543 = vmatpush1.xpose.msra.mxu0 0.0
        %544 = vmatprep.subr.mxu0 0.0
        %545 = vmatpush1.xpose.msra.mxu0 0.0
        %546 = vmatprep.subr.mxu0 0.0
        %547 = vmatpush1.xpose.msra.mxu0 0.0
        %548 = vmatprep.subr.mxu0 0.0
        %549 = vmatpush1.xpose.msra.mxu0 0.0
        %550 = vmatprep.subr.mxu0 0.0
        %551 = vmatpush1.xpose.msra.mxu0 0.0
        %552 = vmatprep.subr.mxu0 0.0
        %553 = vmatpush1.xpose.msra.mxu0 0.0
        %554 = vmatprep.subr.mxu0 0.0
        %555 = vmatpush1.xpose.msra.mxu0 0.0
        %556 = vmatprep.subr.mxu0 0.0
        %557 = vmatpush1.xpose.msra.mxu0 0.0
        %558 = vmatprep.subr.mxu0 0.0
        %559 = vmatpush1.xpose.msra.mxu0 0.0
        %560 = vmatprep.subr.mxu0 0.0
        %561 = vmatpush1.xpose.msra.mxu0 0.0
        %562 = vmatprep.subr.mxu0 0.0
        %563 = vmatpush1.xpose.msra.mxu0 0.0
        %564 = vmatprep.subr.mxu0 0.0
        %565 = vmatpush1.xpose.msra.mxu0 0.0
        %566 = vmatprep.subr.mxu0 0.0
        %567 = vmatpush1.xpose.msra.mxu0 0.0
        %568 = vmatprep.subr.mxu0 0.0
        %569 = vmatpush1.xpose.msra.mxu0 0.0
        %570 = vmatprep.subr.mxu0 0.0
        %571 = vmatpush1.xpose.msra.mxu0 0.0
        %572 = vmatprep.subr.mxu0 0.0
        %573 = vmatpush1.xpose.msra.mxu0 0.0
        %574 = vmatprep.subr.mxu0 0.0
        %575 = vmatpush1.xpose.msra.mxu0 0.0
        %576 = vmatprep.subr.mxu0 0.0
        %577 = vmatpush1.xpose.msra.mxu0 0.0
        %578 = vmatprep.subr.mxu0 0.0
        %579 = vmatpush1.xpose.msra.mxu0 0.0
        %580 = vmatprep.subr.mxu0 0.0
        %581 = vmatpush1.xpose.msra.mxu0 0.0
        %582 = vmatprep.subr.mxu0 0.0
        %583 = vmatpush1.xpose.msra.mxu0 0.0
        %584 = vmatprep.subr.mxu0 0.0
        %585 = vmatpush1.xpose.msra.mxu0 0.0
        %586 = vmatprep.subr.mxu0 0.0
        %587 = vmatpush1.xpose.msra.mxu0 0.0
        %588 = vmatprep.subr.mxu0 0.0
        %589 = vmatpush1.xpose.msra.mxu0 0.0
        %590 = vmatprep.mubr.f32.mxu0 0.0
        %591 = vmatmul.mubr.f32.gmra.mrb[0].mxu0 %v521
        %v592 = vpop.f32.mrb[0].mxu0
        %v593 = vadd.f32 0.0, %v592
        %v594 = vpop.f32.mrb[0].mxu0
        %595 = vdwg.mxu0
        %v597 = vsel %vm367, %v366, 0
        %v600 = vsel %vm367, %v358, 0
        %602 = vmatprep.subr.mxu0 0.0
        %603 = vmatpush1.xpose.msra.mxu0 %v600
        %604 = vmatprep.subr.mxu0 0.0
        %605 = vmatpush1.xpose.msra.mxu0 0.0
        %606 = vmatprep.subr.mxu0 0.0
        %607 = vmatpush1.xpose.msra.mxu0 0.0
        %608 = vmatprep.subr.mxu0 0.0
        %609 = vmatpush1.xpose.msra.mxu0 0.0
        %610 = vmatprep.subr.mxu0 0.0
        %611 = vmatpush1.xpose.msra.mxu0 0.0
        %612 = vmatprep.subr.mxu0 0.0
        %613 = vmatpush1.xpose.msra.mxu0 0.0
        %614 = vmatprep.subr.mxu0 0.0
        %615 = vmatpush1.xpose.msra.mxu0 0.0
        %616 = vmatprep.subr.mxu0 0.0
        %617 = vmatpush1.xpose.msra.mxu0 0.0
        %618 = vmatprep.subr.mxu0 0.0
        %619 = vmatpush1.xpose.msra.mxu0 0.0
        %620 = vmatprep.subr.mxu0 0.0
        %621 = vmatpush1.xpose.msra.mxu0 0.0
        %622 = vmatprep.subr.mxu0 0.0
        %623 = vmatpush1.xpose.msra.mxu0 0.0
        %624 = vmatprep.subr.mxu0 0.0
        %625 = vmatpush1.xpose.msra.mxu0 0.0
        %626 = vmatprep.subr.mxu0 0.0
        %627 = vmatpush1.xpose.msra.mxu0 0.0
        %628 = vmatprep.subr.mxu0 0.0
        %629 = vmatpush1.xpose.msra.mxu0 0.0
        %630 = vmatprep.subr.mxu0 0.0
        %631 = vmatpush1.xpose.msra.mxu0 0.0
        %632 = vmatprep.subr.mxu0 0.0
        %633 = vmatpush1.xpose.msra.mxu0 0.0
        %634 = vmatprep.subr.mxu0 0.0
        %635 = vmatpush1.xpose.msra.mxu0 0.0
        %636 = vmatprep.subr.mxu0 0.0
        %637 = vmatpush1.xpose.msra.mxu0 0.0
        %638 = vmatprep.subr.mxu0 0.0
        %639 = vmatpush1.xpose.msra.mxu0 0.0
        %640 = vmatprep.subr.mxu0 0.0
        %641 = vmatpush1.xpose.msra.mxu0 0.0
        %642 = vmatprep.subr.mxu0 0.0
        %643 = vmatpush1.xpose.msra.mxu0 0.0
        %644 = vmatprep.subr.mxu0 0.0
        %645 = vmatpush1.xpose.msra.mxu0 0.0
        %646 = vmatprep.subr.mxu0 0.0
        %647 = vmatpush1.xpose.msra.mxu0 0.0
        %648 = vmatprep.subr.mxu0 0.0
        %649 = vmatpush1.xpose.msra.mxu0 0.0
        %650 = vmatprep.subr.mxu0 0.0
        %651 = vmatpush1.xpose.msra.mxu0 0.0
        %652 = vmatprep.subr.mxu0 0.0
        %653 = vmatpush1.xpose.msra.mxu0 0.0
        %654 = vmatprep.subr.mxu0 0.0
        %655 = vmatpush1.xpose.msra.mxu0 0.0
        %656 = vmatprep.subr.mxu0 0.0
        %657 = vmatpush1.xpose.msra.mxu0 0.0
        %658 = vmatprep.subr.mxu0 0.0
        %659 = vmatpush1.xpose.msra.mxu0 0.0
        %660 = vmatprep.subr.mxu0 0.0
        %661 = vmatpush1.xpose.msra.mxu0 0.0
        %662 = vmatprep.subr.mxu0 0.0
        %663 = vmatpush1.xpose.msra.mxu0 0.0
        %664 = vmatprep.subr.mxu0 0.0
        %665 = vmatpush1.xpose.msra.mxu0 0.0
        %666 = vmatprep.mubr.f32.mxu0 0.0
        %667 = vmatmul.mubr.f32.gmra.mrb[0].mxu0 %v597
        %v668 = vpop.f32.mrb[0].mxu0
        %v669 = vadd.f32 0.0, %v668
        %v670 = vpop.f32.mrb[0].mxu0
        %671 = vdwg.mxu0
        %vm672 = vcmask 64512
        %v673 = vsel %vm672, %v441, -inf
        %674 = vmax.xlane.f32.xlu0 %v673
        %v675 = vpop.xlane.xlu0 %674
        %v676 = vsel %vm672, %v517, -inf
        %677 = vmax.xlane.f32.xlu0 %v676
        %v678 = vpop.xlane.xlu0 %677
        %v679 = vsel %vm672, %v593, -inf
        %680 = vmax.xlane.f32.xlu0 %v679
        %v681 = vpop.xlane.xlu0 %680
        %v682 = vsel %vm672, %v669, -inf
        %683 = vmax.xlane.f32.xlu0 %v682
        %v684 = vpop.xlane.xlu0 %683
        %v685 = vsub.f32 %v441, %v675
        %v686 = vsub.f32 %v517, %v678
        %v687 = vsub.f32 %v593, %v681
        %v688 = vsub.f32 %v669, %v684
        %v689 = vmul.f32 %v685, 1.442695
        %v690 = vpow.pop %v689
        %v691 = vmul.f32 %v686, 1.442695
        %v692 = vpow.pop %v691
        %v693 = vmul.f32 %v687, 1.442695
        %v694 = vpow.pop %v693
        %v695 = vmul.f32 %v688, 1.442695
        %v696 = vpow.pop %v695
        %v697 = vsel %vm672, %v690, 0.0
        %698 = vadd.xlane.f32.xlu0 %v697
        %v699 = vpop.xlane.xlu0 %698
        %v700 = vsel %vm672, %v692, 0.0
        %701 = vadd.xlane.f32.xlu0 %v700
        %v702 = vpop.xlane.xlu0 %701
        %v703 = vsel %vm672, %v694, 0.0
        %704 = vadd.xlane.f32.xlu0 %v703
        %v705 = vpop.xlane.xlu0 %704
        %v706 = vsel %vm672, %v696, 0.0
        %707 = vadd.xlane.f32.xlu0 %v706
        %v708 = vpop.xlane.xlu0 %707
        %v709 = vrcp.pop %v699
        %v710 = vmul.f32 %v690, %v709
        %v711 = vrcp.pop %v702
        %v712 = vmul.f32 %v692, %v711
        %v713 = vrcp.pop %v705
        %v714 = vmul.f32 %v694, %v713
        %v715 = vrcp.pop %v708
        %v716 = vmul.f32 %v696, %v715
        %v718 = vsel %vm672, %v710, 0
        %720 = vmatprep.subr.mxu0 0.0
        %721 = vmatpush1.msra.mxu0 %v359
        %722 = vmatprep.subr.mxu0 0.0
        %723 = vmatpush1.msra.mxu0 0.0
        %724 = vmatprep.subr.mxu0 0.0
        %725 = vmatpush1.msra.mxu0 0.0
        %726 = vmatprep.subr.mxu0 0.0
        %727 = vmatpush1.msra.mxu0 0.0
        %728 = vmatprep.subr.mxu0 0.0
        %729 = vmatpush1.msra.mxu0 0.0
        %730 = vmatprep.subr.mxu0 0.0
        %731 = vmatpush1.msra.mxu0 0.0
        %732 = vmatprep.subr.mxu0 0.0
        %733 = vmatpush1.msra.mxu0 0.0
        %734 = vmatprep.subr.mxu0 0.0
        %735 = vmatpush1.msra.mxu0 0.0
        %736 = vmatprep.subr.mxu0 0.0
        %737 = vmatpush1.msra.mxu0 0.0
        %738 = vmatprep.subr.mxu0 0.0
        %739 = vmatpush1.msra.mxu0 0.0
        %740 = vmatprep.subr.mxu0 0.0
        %741 = vmatpush1.msra.mxu0 0.0
        %742 = vmatprep.subr.mxu0 0.0
        %743 = vmatpush1.msra.mxu0 0.0
        %744 = vmatprep.subr.mxu0 0.0
        %745 = vmatpush1.msra.mxu0 0.0
        %746 = vmatprep.subr.mxu0 0.0
        %747 = vmatpush1.msra.mxu0 0.0
        %748 = vmatprep.subr.mxu0 0.0
        %749 = vmatpush1.msra.mxu0 0.0
        %750 = vmatprep.subr.mxu0 0.0
        %751 = vmatpush1.msra.mxu0 0.0
        %752 = vmatprep.subr.mxu0 0.0
        %753 = vmatpush1.msra.mxu0 0.0
        %754 = vmatprep.subr.mxu0 0.0
        %755 = vmatpush1.msra.mxu0 0.0
        %756 = vmatprep.subr.mxu0 0.0
        %757 = vmatpush1.msra.mxu0 0.0
        %758 = vmatprep.subr.mxu0 0.0
        %759 = vmatpush1.msra.mxu0 0.0
        %760 = vmatprep.subr.mxu0 0.0
        %761 = vmatpush1.msra.mxu0 0.0
        %762 = vmatprep.subr.mxu0 0.0
        %763 = vmatpush1.msra.mxu0 0.0
        %764 = vmatprep.subr.mxu0 0.0
        %765 = vmatpush1.msra.mxu0 0.0
        %766 = vmatprep.subr.mxu0 0.0
        %767 = vmatpush1.msra.mxu0 0.0
        %768 = vmatprep.subr.mxu0 0.0
        %769 = vmatpush1.msra.mxu0 0.0
        %770 = vmatprep.subr.mxu0 0.0
        %771 = vmatpush1.msra.mxu0 0.0
        %772 = vmatprep.subr.mxu0 0.0
        %773 = vmatpush1.msra.mxu0 0.0
        %774 = vmatprep.subr.mxu0 0.0
        %775 = vmatpush1.msra.mxu0 0.0
        %776 = vmatprep.subr.mxu0 0.0
        %777 = vmatpush1.msra.mxu0 0.0
        %778 = vmatprep.subr.mxu0 0.0
        %779 = vmatpush1.msra.mxu0 0.0
        %780 = vmatprep.subr.mxu0 0.0
        %781 = vmatpush1.msra.mxu0 0.0
        %782 = vmatprep.subr.mxu0 0.0
        %783 = vmatpush1.msra.mxu0 0.0
        %784 = vmatprep.mubr.f32.mxu0 0.0
        %785 = vmatmul.mubr.f32.gmra.mrb[0].mxu0 %v718
        %v786 = vpop.f32.mrb[0].mxu0
        %v787 = vadd.f32 %v351, %v786
        %v788 = vpop.f32.mrb[0].mxu0
        %789 = vdwg.mxu0
        %v791 = vsel %vm672, %v712, 0
        %793 = vmatprep.subr.mxu0 0.0
        %794 = vmatpush1.msra.mxu0 %v360
        %795 = vmatprep.subr.mxu0 0.0
        %796 = vmatpush1.msra.mxu0 0.0
        %797 = vmatprep.subr.mxu0 0.0
        %798 = vmatpush1.msra.mxu0 0.0
        %799 = vmatprep.subr.mxu0 0.0
        %800 = vmatpush1.msra.mxu0 0.0
        %801 = vmatprep.subr.mxu0 0.0
        %802 = vmatpush1.msra.mxu0 0.0
        %803 = vmatprep.subr.mxu0 0.0
        %804 = vmatpush1.msra.mxu0 0.0
        %805 = vmatprep.subr.mxu0 0.0
        %806 = vmatpush1.msra.mxu0 0.0
        %807 = vmatprep.subr.mxu0 0.0
        %808 = vmatpush1.msra.mxu0 0.0
        %809 = vmatprep.subr.mxu0 0.0
        %810 = vmatpush1.msra.mxu0 0.0
        %811 = vmatprep.subr.mxu0 0.0
        %812 = vmatpush1.msra.mxu0 0.0
        %813 = vmatprep.subr.mxu0 0.0
        %814 = vmatpush1.msra.mxu0 0.0
        %815 = vmatprep.subr.mxu0 0.0
        %816 = vmatpush1.msra.mxu0 0.0
        %817 = vmatprep.subr.mxu0 0.0
        %818 = vmatpush1.msra.mxu0 0.0
        %819 = vmatprep.subr.mxu0 0.0
        %820 = vmatpush1.msra.mxu0 0.0
        %821 = vmatprep.subr.mxu0 0.0
        %822 = vmatpush1.msra.mxu0 0.0
        %823 = vmatprep.subr.mxu0 0.0
        %824 = vmatpush1.msra.mxu0 0.0
        %825 = vmatprep.subr.mxu0 0.0
        %826 = vmatpush1.msra.mxu0 0.0
        %827 = vmatprep.subr.mxu0 0.0
        %828 = vmatpush1.msra.mxu0 0.0
        %829 = vmatprep.subr.mxu0 0.0
        %830 = vmatpush1.msra.mxu0 0.0
        %831 = vmatprep.subr.mxu0 0.0
        %832 = vmatpush1.msra.mxu0 0.0
        %833 = vmatprep.subr.mxu0 0.0
        %834 = vmatpush1.msra.mxu0 0.0
        %835 = vmatprep.subr.mxu0 0.0
        %836 = vmatpush1.msra.mxu0 0.0
        %837 = vmatprep.subr.mxu0 0.0
        %838 = vmatpush1.msra.mxu0 0.0
        %839 = vmatprep.subr.mxu0 0.0
        %840 = vmatpush1.msra.mxu0 0.0
        %841 = vmatprep.subr.mxu0 0.0
        %842 = vmatpush1.msra.mxu0 0.0
        %843 = vmatprep.subr.mxu0 0.0
        %844 = vmatpush1.msra.mxu0 0.0
        %845 = vmatprep.subr.mxu0 0.0
        %846 = vmatpush1.msra.mxu0 0.0
        %847 = vmatprep.subr.mxu0 0.0
        %848 = vmatpush1.msra.mxu0 0.0
        %849 = vmatprep.subr.mxu0 0.0
        %850 = vmatpush1.msra.mxu0 0.0
        %851 = vmatprep.subr.mxu0 0.0
        %852 = vmatpush1.msra.mxu0 0.0
        %853 = vmatprep.subr.mxu0 0.0
        %854 = vmatpush1.msra.mxu0 0.0
        %855 = vmatprep.subr.mxu0 0.0
        %856 = vmatpush1.msra.mxu0 0.0
        %857 = vmatprep.mubr.f32.mxu0 0.0
        %858 = vmatmul.mubr.f32.gmra.mrb[0].mxu0 %v791
        %v859 = vpop.f32.mrb[0].mxu0
        %v860 = vadd.f32 %v352, %v859
        %v861 = vpop.f32.mrb[0].mxu0
        %862 = vdwg.mxu0
        %v864 = vsel %vm672, %v714, 0
        %866 = vmatprep.subr.mxu0 0.0
        %867 = vmatpush1.msra.mxu0 %v361
        %868 = vmatprep.subr.mxu0 0.0
        %869 = vmatpush1.msra.mxu0 0.0
        %870 = vmatprep.subr.mxu0 0.0
        %871 = vmatpush1.msra.mxu0 0.0
        %872 = vmatprep.subr.mxu0 0.0
        %873 = vmatpush1.msra.mxu0 0.0
        %874 = vmatprep.subr.mxu0 0.0
        %875 = vmatpush1.msra.mxu0 0.0
        %876 = vmatprep.subr.mxu0 0.0
        %877 = vmatpush1.msra.mxu0 0.0
        %878 = vmatprep.subr.mxu0 0.0
        %879 = vmatpush1.msra.mxu0 0.0
        %880 = vmatprep.subr.mxu0 0.0
        %881 = vmatpush1.msra.mxu0 0.0
        %882 = vmatprep.subr.mxu0 0.0
        %883 = vmatpush1.msra.mxu0 0.0
        %884 = vmatprep.subr.mxu0 0.0
        %885 = vmatpush1.msra.mxu0 0.0
        %886 = vmatprep.subr.mxu0 0.0
        %887 = vmatpush1.msra.mxu0 0.0
        %888 = vmatprep.subr.mxu0 0.0
        %889 = vmatpush1.msra.mxu0 0.0
        %890 = vmatprep.subr.mxu0 0.0
        %891 = vmatpush1.msra.mxu0 0.0
        %892 = vmatprep.subr.mxu0 0.0
        %893 = vmatpush1.msra.mxu0 0.0
        %894 = vmatprep.subr.mxu0 0.0
        %895 = vmatpush1.msra.mxu0 0.0
        %896 = vmatprep.subr.mxu0 0.0
        %897 = vmatpush1.msra.mxu0 0.0
        %898 = vmatprep.subr.mxu0 0.0
        %899 = vmatpush1.msra.mxu0 0.0
        %900 = vmatprep.subr.mxu0 0.0
        %901 = vmatpush1.msra.mxu0 0.0
        %902 = vmatprep.subr.mxu0 0.0
        %903 = vmatpush1.msra.mxu0 0.0
        %904 = vmatprep.subr.mxu0 0.0
        %905 = vmatpush1.msra.mxu0 0.0
        %906 = vmatprep.subr.mxu0 0.0
        %907 = vmatpush1.msra.mxu0 0.0
        %908 = vmatprep.subr.mxu0 0.0
        %909 = vmatpush1.msra.mxu0 0.0
        %910 = vmatprep.subr.mxu0 0.0
        %911 = vmatpush1.msra.mxu0 0.0
        %912 = vmatprep.subr.mxu0 0.0
        %913 = vmatpush1.msra.mxu0 0.0
        %914 = vmatprep.subr.mxu0 0.0
        %915 = vmatpush1.msra.mxu0 0.0
        %916 = vmatprep.subr.mxu0 0.0
        %917 = vmatpush1.msra.mxu0 0.0
        %918 = vmatprep.subr.mxu0 0.0
        %919 = vmatpush1.msra.mxu0 0.0
        %920 = vmatprep.subr.mxu0 0.0
        %921 = vmatpush1.msra.mxu0 0.0
        %922 = vmatprep.subr.mxu0 0.0
        %923 = vmatpush1.msra.mxu0 0.0
        %924 = vmatprep.subr.mxu0 0.0
        %925 = vmatpush1.msra.mxu0 0.0
        %926 = vmatprep.subr.mxu0 0.0
        %927 = vmatpush1.msra.mxu0 0.0
        %928 = vmatprep.subr.mxu0 0.0
        %929 = vmatpush1.msra.mxu0 0.0
        %930 = vmatprep.mubr.f32.mxu0 0.0
        %931 = vmatmul.mubr.f32.gmra.mrb[0].mxu0 %v864
        %v932 = vpop.f32.mrb[0].mxu0
        %v933 = vadd.f32 %v353, %v932
        %v934 = vpop.f32.mrb[0].mxu0
        %935 = vdwg.mxu0
        %v937 = vsel %vm672, %v716, 0
        %939 = vmatprep.subr.mxu0 0.0
        %940 = vmatpush1.msra.mxu0 %v362
        %941 = vmatprep.subr.mxu0 0.0
        %942 = vmatpush1.msra.mxu0 0.0
        %943 = vmatprep.subr.mxu0 0.0
        %944 = vmatpush1.msra.mxu0 0.0
        %945 = vmatprep.subr.mxu0 0.0
        %946 = vmatpush1.msra.mxu0 0.0
        %947 = vmatprep.subr.mxu0 0.0
        %948 = vmatpush1.msra.mxu0 0.0
        %949 = vmatprep.subr.mxu0 0.0
        %950 = vmatpush1.msra.mxu0 0.0
        %951 = vmatprep.subr.mxu0 0.0
        %952 = vmatpush1.msra.mxu0 0.0
        %953 = vmatprep.subr.mxu0 0.0
        %954 = vmatpush1.msra.mxu0 0.0
        %955 = vmatprep.subr.mxu0 0.0
        %956 = vmatpush1.msra.mxu0 0.0
        %957 = vmatprep.subr.mxu0 0.0
        %958 = vmatpush1.msra.mxu0 0.0
        %959 = vmatprep.subr.mxu0 0.0
        %960 = vmatpush1.msra.mxu0 0.0
        %961 = vmatprep.subr.mxu0 0.0
        %962 = vmatpush1.msra.mxu0 0.0
        %963 = vmatprep.subr.mxu0 0.0
        %964 = vmatpush1.msra.mxu0 0.0
        %965 = vmatprep.subr.mxu0 0.0
        %966 = vmatpush1.msra.mxu0 0.0
        %967 = vmatprep.subr.mxu0 0.0
        %968 = vmatpush1.msra.mxu0 0.0
        %969 = vmatprep.subr.mxu0 0.0
        %970 = vmatpush1.msra.mxu0 0.0
        %971 = vmatprep.subr.mxu0 0.0
        %972 = vmatpush1.msra.mxu0 0.0
        %973 = vmatprep.subr.mxu0 0.0
        %974 = vmatpush1.msra.mxu0 0.0
        %975 = vmatprep.subr.mxu0 0.0
        %976 = vmatpush1.msra.mxu0 0.0
        %977 = vmatprep.subr.mxu0 0.0
        %978 = vmatpush1.msra.mxu0 0.0
        %979 = vmatprep.subr.mxu0 0.0
        %980 = vmatpush1.msra.mxu0 0.0
        %981 = vmatprep.subr.mxu0 0.0
        %982 = vmatpush1.msra.mxu0 0.0
        %983 = vmatprep.subr.mxu0 0.0
        %984 = vmatpush1.msra.mxu0 0.0
        %985 = vmatprep.subr.mxu0 0.0
        %986 = vmatpush1.msra.mxu0 0.0
        %987 = vmatprep.subr.mxu0 0.0
        %988 = vmatpush1.msra.mxu0 0.0
        %989 = vmatprep.subr.mxu0 0.0
        %990 = vmatpush1.msra.mxu0 0.0
        %991 = vmatprep.subr.mxu0 0.0
        %992 = vmatpush1.msra.mxu0 0.0
        %993 = vmatprep.subr.mxu0 0.0
        %994 = vmatpush1.msra.mxu0 0.0
        %995 = vmatprep.subr.mxu0 0.0
        %996 = vmatpush1.msra.mxu0 0.0
        %997 = vmatprep.subr.mxu0 0.0
        %998 = vmatpush1.msra.mxu0 0.0
        %999 = vmatprep.subr.mxu0 0.0
        %1000 = vmatpush1.msra.mxu0 0.0
        %1001 = vmatprep.subr.mxu0 0.0
        %1002 = vmatpush1.msra.mxu0 0.0
        %1003 = vmatprep.mubr.f32.mxu0 0.0
        %1004 = vmatmul.mubr.f32.gmra.mrb[0].mxu0 %v937
        %v1005 = vpop.f32.mrb[0].mxu0
        %v1006 = vadd.f32 %v354, %v1005
        %v1007 = vpop.f32.mrb[0].mxu0
        %1008 = vdwg.mxu0
        %1009 = vst.msk [vmem:[%s338] sm:$0xff] %vm367, %v787
        %1010 = vst.msk [vmem:[%s338 + $0x8] sm:$0xff] %vm367, %v860
        %1011 = vst.msk [vmem:[%s338 + $0x10] sm:$0xff] %vm367, %v933
        %1012 = vst.msk [vmem:[%s338 + $0x18] sm:$0xff] %vm367, %v1006
        %1013 = vst.msk [vmem:[%s345] sm:$0xff] %vm672, %v710
        %1014 = vst.msk [vmem:[%s345 + $0x8] sm:$0xff] %vm672, %v712
        %1015 = vst.msk [vmem:[%s345 + $0x10] sm:$0xff] %vm672, %v714
        %1016 = vst.msk [vmem:[%s345 + $0x18] sm:$0xff] %vm672, %v716
        %s1017 = sand.u32 %s145, 1
        %s1018 = scalar_lea.sflag [#allocation4], %s1017
        %s1019 = sand.u32 %s145, 1
        %s1020 = smul.addr %s1019, 32
        %s1021 = scalar_lea.vmem [#allocation8], %s1020
        %s1022 = sand.u32 %s175, 1
        %s1023 = scalar_lea.sflag [#allocation10], %s1022
        %s1024 = sand.u32 %s175, 1
        %s1025 = smul.addr %s1024, 32
        %s1026 = scalar_lea.vmem [#allocation9], %s1025
        // Predicated region
        $region45: #{tpu_custom_call.1} parent=31 // pred_check
          %p1027 = pneg %p155
        $region46: #{tpu_custom_call.1} parent=31 // pred_check_branch
          %1029 = sbr.rel (%p1027) target = $region48
        $region47: #{tpu_custom_call.1} parent=31 // pred_region
          %s1030 = smul.u32 4, %s34
          %s1032 = ssub.s32 512, 512
          %1033 = vsyncadd %s1018, %s1032
          %s1034 = sadd.s32 %s35, %s1030
          %s1035 = smul.addr %s33, 4
          %s1036 = sadd.s32 %s1034, %s1035
          %s1037 = smul.addr %s1036, 128
          %s1038 = scalar_lea.hbm %s3, %s1037
          %s1039 = sshll.u32 %s1021, 4
          %s1040 = int_to_ptr.vmem [resolvable:$true] %s1039
          %1045 = dma.vmem_to_hbm [thread:$0]  %s1040, 512, %s1038, %s1018, 128, 128, 8
        $region48: #{tpu_custom_call.1} parent=31 // pred_fallthru
          _
        // Predicated region
        $region49: #{tpu_custom_call.1} parent=31 // pred_check
          %p1046 = pneg %p185
        $region50: #{tpu_custom_call.1} parent=31 // pred_check_branch
          %1048 = sbr.rel (%p1046) target = $region52
        $region51: #{tpu_custom_call.1} parent=31 // pred_region
          %s1049 = smul.u32 4, %s34
          %s1051 = ssub.s32 512, 512
          %1052 = vsyncadd %s1023, %s1051
          %s1053 = sadd.s32 %s35, %s1049
          %s1054 = smul.addr %s33, 4
          %s1055 = sadd.s32 %s1053, %s1054
          %s1056 = smul.addr %s1055, 128
          %s1057 = scalar_lea.hbm %s4, %s1056
          %s1058 = sshll.u32 %s1026, 4
          %s1059 = int_to_ptr.vmem [resolvable:$true] %s1058
          %1064 = dma.vmem_to_hbm [thread:$0]  %s1059, 512, %s1057, %s1023, 128, 128, 8
        $region52: #{tpu_custom_call.1} parent=31 // pred_fallthru
          _
      $region32: #{tpu_custom_call.1} parent=5 // pred_fallthru
        _
      %p1065 = scmp.le.s32.totalorder 2, %s23
      // Predicated region
      $region53: #{tpu_custom_call.1} parent=5 // pred_check
        %p1066 = pneg %p1065
      $region54: #{tpu_custom_call.1} parent=5 // pred_check_branch
        %1068 = sbr.rel (%p1066) target = $region56
      $region55: #{tpu_custom_call.1} parent=5 // pred_region
        %s1069 = ssub.s32 %s23, 2
        // Predicated region
        $region57: #{tpu_custom_call.1} parent=55 // pred_check
          %p1070 = pneg %p161
        $region58: #{tpu_custom_call.1} parent=55 // pred_check_branch
          %1072 = sbr.rel (%p1070) target = $region60
        $region59: #{tpu_custom_call.1} parent=55 // pred_region
          %s1073 = sand.u32 %s146, 1
          %s1074 = scalar_lea.sflag [#allocation4], %s1073
          %s1075 = sand.u32 %s146, 1
          %s1076 = smul.addr %s1075, 32
          %s1077 = scalar_lea.vmem [#allocation8], %s1076
          %1078 = dma.done %s1074, 512
        $region60: #{tpu_custom_call.1} parent=55 // pred_fallthru
          _
        // Predicated region
        $region61: #{tpu_custom_call.1} parent=55 // pred_check
          %p1079 = pneg %p191
        $region62: #{tpu_custom_call.1} parent=55 // pred_check_branch
          %1081 = sbr.rel (%p1079) target = $region64
        $region63: #{tpu_custom_call.1} parent=55 // pred_region
          %s1082 = sand.u32 %s176, 1
          %s1083 = scalar_lea.sflag [#allocation10], %s1082
          %s1084 = sand.u32 %s176, 1
          %s1085 = smul.addr %s1084, 32
          %s1086 = scalar_lea.vmem [#allocation9], %s1085
          %1087 = dma.done %s1083, 512
        $region64: #{tpu_custom_call.1} parent=55 // pred_fallthru
          _
      $region56: #{tpu_custom_call.1} parent=5 // pred_fallthru
        _
    $region6: #{tpu_custom_call.1} parent=1 // loop_footer
      %s27 = sadd.s32 1, %s23
    $region7: #{tpu_custom_call.1} parent=1 // loop_footer_branch
      %22 = sbr.rel target = $region3
    $region8: #{tpu_custom_call.1} parent=1 // loop_exit
      _
    %1088 = vsyncpa [#allocation3], 1
    %s1089 = scalar_lea.sflag [#allocation3], 1
    %1090 = vsyncpa %s1089, 1
    %1091 = vsyncpa [#allocation6], 1
    %s1092 = scalar_lea.sflag [#allocation6], 1
    %1093 = vsyncpa %s1092, 1
    %1094 = vsyncpa [#allocation4], 1
    %s1095 = scalar_lea.sflag [#allocation4], 1
    %1096 = vsyncpa %s1095, 1
    %1097 = vsyncpa [#allocation10], 1
    %s1098 = scalar_lea.sflag [#allocation10], 1
    %1099 = vsyncpa %s1098, 1

</llo_original>
